<compile_context>
chip_gen: v5e
topology: v5e:2x2
jax: 0.10.0
libtpu: 0.0.40
codegen_flags: <defaults>
</compile_context>

<pallas_src>
from functools import partial

import jax
import jax.numpy as jnp
from jax.experimental import pallas as pl
from jax.experimental.pallas import tpu as pltpu

INPUT_SIZE = 6      # ['sst','day_of_year','latitude','longitude','N_0','time']
HIDDEN_SIZE = 64
HIDDEN2_SIZE = HIDDEN_SIZE // 2
OUTPUT_SIZE = 5     # ['N','P','Z','D','chlorophyll']

LANE = 128
DEFAULT_TILE_B = 16384   # first thing to sweep; fits default scoped VMEM on all chips


def _round_up(a, b):
    return ((a + b - 1) // b) * b


def _tpu_config():
    """Return (epilogue/accumulate dtype for layers 1-2, min grid steps)."""
    try:
        kind = jax.devices()[0].device_kind.lower()
    except Exception:
        kind = ""
    is_v7 = ("v7" in kind) or ("7x" in kind)
    is_v6 = "v6" in kind
    # bf16 epilogue only where the VPU has native bf16 (v6e / v7x); f32 elsewhere.
    acc_dtype = jnp.bfloat16 if (is_v6 or is_v7) else jnp.float32
    # v7x has 2 TensorCores: make sure the "parallel" batch grid has >= 2 steps.
    min_steps = 2 if is_v7 else 1
    return acc_dtype, min_steps


def _npznet_kernel(xT_ref, w1_ref, b1_ref, w2_ref, b2_ref, w3_ref, b3_ref,
                   oT_ref, *, acc_dtype):
    # All activations are (features, TILE_B): batch on the lane axis.
    x = xT_ref[...]                                                     # (6, TB) bf16

    # layer1: Linear(6, 64) + ReLU   -> (64, TB)
    h1 = jnp.dot(w1_ref[...], x, preferred_element_type=acc_dtype)
    h1 = jnp.maximum(h1 + b1_ref[...], 0).astype(jnp.bfloat16)

    # layer2: Linear(64, 32) + ReLU  -> (32, TB)
    h2 = jnp.dot(w2_ref[...], h1, preferred_element_type=acc_dtype)
    h2 = jnp.maximum(h2 + b2_ref[...], 0).astype(jnp.bfloat16)

    # output_layer: Linear(32, 5)    -> (5, TB), f32 accumulate + f32 store
    out = jnp.dot(w3_ref[...], h2, preferred_element_type=jnp.float32)
    oT_ref[...] = (out + b3_ref[...]).astype(oT_ref.dtype)


def npznet_forward_transposed(xT, params, *, tile_b=DEFAULT_TILE_B, acc_dtype=None):
    """Lane-major entry point: xT is (6, B) bf16 with B a multiple of the tile.

    Returns (5, B) float32.  Use this directly to skip the wrapper-side layout
    passes when the producer/consumer can handle the transposed layout.
    """
    if acc_dtype is None:
        acc_dtype, _ = _tpu_config()
    w1, b1, w2, b2, w3, b3 = params
    B = xT.shape[1]
    tb = min(tile_b, B)
    assert B % tb == 0, "batch (lane) extent must be a multiple of the tile"
    grid = (B // tb,)

    kernel = partial(_npznet_kernel, acc_dtype=acc_dtype)

    return pl.pallas_call(
        kernel,
        out_shape=jax.ShapeDtypeStruct((OUTPUT_SIZE, B), jnp.float32),
        grid=grid,
        in_specs=[
            # streamed activations: tile over the (lane) batch axis
            pl.BlockSpec((INPUT_SIZE, tb), lambda i: (0, i)),
            # weights/biases: full arrays, constant block index -> VMEM-resident
            pl.BlockSpec((HIDDEN_SIZE, INPUT_SIZE), lambda i: (0, 0)),
            pl.BlockSpec((HIDDEN_SIZE, 1), lambda i: (0, 0)),
            pl.BlockSpec((HIDDEN2_SIZE, HIDDEN_SIZE), lambda i: (0, 0)),
            pl.BlockSpec((HIDDEN2_SIZE, 1), lambda i: (0, 0)),
            pl.BlockSpec((OUTPUT_SIZE, HIDDEN2_SIZE), lambda i: (0, 0)),
            pl.BlockSpec((OUTPUT_SIZE, 1), lambda i: (0, 0)),
        ],
        out_specs=pl.BlockSpec((OUTPUT_SIZE, tb), lambda i: (0, i)),
        compiler_params=pltpu.CompilerParams(
            dimension_semantics=("parallel",),
            vmem_limit_bytes=32 * 1024 * 1024,
        ),
    )(xT, w1, b1.astype(acc_dtype), w2, b2.astype(acc_dtype), w3, b3)


@partial(jax.jit, static_argnames=("tile_b",))
def npznet_forward(x, params, tile_b=DEFAULT_TILE_B):
    """x: (batch, 6) float32 -> (batch, 5) float32.  Matches NPZNet.forward."""
    batch = x.shape[0]
    acc_dtype, min_steps = _tpu_config()

    # Tile selection: lane-aligned, as large as allowed, and (on v7x) capped so
    # the "parallel" grid has at least 2 steps for the 2-TC megacore split.
    padded = _round_up(batch, LANE)
    tb = min(tile_b, padded)
    if min_steps > 1 and padded >= min_steps * LANE:
        tb = min(tb, _round_up(pl.cdiv(padded, min_steps), LANE))
    padded = _round_up(padded, tb)

    # pad + bf16 cast + transpose fuse into a single XLA pass under jit.
    x_pad = jnp.pad(x, ((0, padded - batch), (0, 0)))
    xT = x_pad.astype(jnp.bfloat16).T                      # (6, padded): batch on lanes

    outT = npznet_forward_transposed(xT, params, tile_b=tb, acc_dtype=acc_dtype)
    return outT[:, :batch].T                               # (batch, 5), fused under jit


def init_params(key):
    """PyTorch nn.Linear-style init: U(-1/sqrt(fan_in), 1/sqrt(fan_in)).

    Weights stored in PyTorch (fan_out, fan_in) layout (kernel computes W @ x^T),
    cast to bf16; biases stored f32 with shape (fan_out, 1) so they broadcast
    along the lane (batch) axis.
    """
    keys = jax.random.split(key, 6)

    def linear(kw, kb, fan_in, fan_out):
        bound = 1.0 / jnp.sqrt(jnp.float32(fan_in))
        w = jax.random.uniform(kw, (fan_out, fan_in), jnp.float32, -bound, bound)
        b = jax.random.uniform(kb, (fan_out, 1), jnp.float32, -bound, bound)
        return w.astype(jnp.bfloat16), b

    w1, b1 = linear(keys[0], keys[1], INPUT_SIZE, HIDDEN_SIZE)
    w2, b2 = linear(keys[2], keys[3], HIDDEN_SIZE, HIDDEN2_SIZE)
    w3, b3 = linear(keys[4], keys[5], HIDDEN2_SIZE, OUTPUT_SIZE)
    return (w1, b1, w2, b2, w3, b3)


def npznet_ref(x, params, acc_dtype=None):
    """Pure-JAX reference mirroring the kernel's dtype pipeline."""
    if acc_dtype is None:
        acc_dtype, _ = _tpu_config()
    w1, b1, w2, b2, w3, b3 = params
    xb = x.astype(jnp.bfloat16)
    h1 = jnp.maximum(
        jnp.dot(xb, w1.T, preferred_element_type=acc_dtype) + b1.T.astype(acc_dtype), 0)
    h1 = h1.astype(jnp.bfloat16)
    h2 = jnp.maximum(
        jnp.dot(h1, w2.T, preferred_element_type=acc_dtype) + b2.T.astype(acc_dtype), 0)
    h2 = h2.astype(jnp.bfloat16)
    return jnp.dot(h2, w3.T, preferred_element_type=jnp.float32) + b3.T


if __name__ == "__main__":
    key = jax.random.PRNGKey(0)
    k_params, k_x1, k_x2 = jax.random.split(key, 3)

    params = init_params(k_params)

    # Small sanity check (single grid step).
    batch = 8
    x = jax.random.normal(k_x1, (batch, INPUT_SIZE), dtype=jnp.float32)
    out = jax.block_until_ready(npznet_forward(x, params))
    ref = npznet_ref(x, params)
    assert out.shape == (batch, OUTPUT_SIZE)
    assert jnp.allclose(out, ref, atol=2e-2, rtol=2e-2)

    # Multi-step grid + non-multiple-of-128 batch (exercises padding path).
    batch2 = 300
    x2 = jax.random.normal(k_x2, (batch2, INPUT_SIZE), dtype=jnp.float32)
    out2 = jax.block_until_ready(npznet_forward(x2, params, tile_b=128))
    ref2 = npznet_ref(x2, params)
    assert out2.shape == (batch2, OUTPUT_SIZE)
    assert jnp.allclose(out2, ref2, atol=2e-2, rtol=2e-2)

    print("KERNEL_OK")
</pallas_src>

<mosaic_0001>
module attributes {stable_mosaic.version = 11 : i64} {
  func.func @_npznet_kernel(%arg0: i32, %arg1: memref<6x128xbf16, #tpu.memory_space<vmem>>, %arg2: memref<64x6xbf16, #tpu.memory_space<vmem>>, %arg3: memref<64x1xf32, #tpu.memory_space<vmem>>, %arg4: memref<32x64xbf16, #tpu.memory_space<vmem>>, %arg5: memref<32x1xf32, #tpu.memory_space<vmem>>, %arg6: memref<5x32xbf16, #tpu.memory_space<vmem>>, %arg7: memref<5x1xf32, #tpu.memory_space<vmem>>, %arg8: memref<5x128xf32, #tpu.memory_space<vmem>>) attributes {dimension_semantics = [#tpu.dimension_semantics<parallel>], iteration_bounds = array<i64: 1>, scalar_prefetch = 0 : i64, scratch_operands = 0 : i64, tpu.core_type = #tpu.core_type<tc>, window_params = [{transform_indices = @transform_0, window_bounds = array<i64: 6, 128>}, {pipeline_mode = #tpu.pipeline_mode<synchronous>, transform_indices = @transform_1, window_bounds = array<i64: 64, 6>}, {pipeline_mode = #tpu.pipeline_mode<synchronous>, transform_indices = @transform_2, window_bounds = array<i64: 64, 1>}, {pipeline_mode = #tpu.pipeline_mode<synchronous>, transform_indices = @transform_3, window_bounds = array<i64: 32, 64>}, {pipeline_mode = #tpu.pipeline_mode<synchronous>, transform_indices = @transform_4, window_bounds = array<i64: 32, 1>}, {pipeline_mode = #tpu.pipeline_mode<synchronous>, transform_indices = @transform_5, window_bounds = array<i64: 5, 32>}, {pipeline_mode = #tpu.pipeline_mode<synchronous>, transform_indices = @transform_6, window_bounds = array<i64: 5, 1>}, {transform_indices = @transform_7, window_bounds = array<i64: 5, 128>}]} {
    %c0 = arith.constant 0 : index
    %c0_0 = arith.constant 0 : index
    %0 = vector.load %arg1[%c0, %c0_0] : memref<6x128xbf16, #tpu.memory_space<vmem>>, vector<6x128xbf16>
    %c0_1 = arith.constant 0 : index
    %c0_2 = arith.constant 0 : index
    %1 = vector.load %arg2[%c0_1, %c0_2] : memref<64x6xbf16, #tpu.memory_space<vmem>>, vector<64x6xbf16>
    %cst = arith.constant dense<0.000000e+00> : vector<64x128xf32>
    %2 = tpu.matmul %1, %0, %cst {dimension_numbers = #tpu.dot_dimension_numbers<[1], [0], [0], [1], [0, 0, 1, 1], [], []>} : vector<64x6xbf16>, vector<6x128xbf16>, vector<64x128xf32> -> vector<64x128xf32>
    %c0_3 = arith.constant 0 : index
    %c0_4 = arith.constant 0 : index
    %3 = vector.load %arg3[%c0_3, %c0_4] : memref<64x1xf32, #tpu.memory_space<vmem>>, vector<64x1xf32>
    %4 = vector.broadcast %3 : vector<64x1xf32> to vector<64x128xf32>
    %5 = arith.addf %2, %4 : vector<64x128xf32>
    %cst_5 = arith.constant 0.000000e+00 : f32
    %6 = vector.broadcast %cst_5 : f32 to vector<64x128xf32>
    %7 = arith.maximumf %5, %6 : vector<64x128xf32>
    %8 = arith.truncf %7 : vector<64x128xf32> to vector<64x128xbf16>
    %c0_6 = arith.constant 0 : index
    %c0_7 = arith.constant 0 : index
    %9 = vector.load %arg4[%c0_6, %c0_7] : memref<32x64xbf16, #tpu.memory_space<vmem>>, vector<32x64xbf16>
    %cst_8 = arith.constant dense<0.000000e+00> : vector<32x128xf32>
    %10 = tpu.matmul %9, %8, %cst_8 {dimension_numbers = #tpu.dot_dimension_numbers<[1], [0], [0], [1], [0, 0, 1, 1], [], []>} : vector<32x64xbf16>, vector<64x128xbf16>, vector<32x128xf32> -> vector<32x128xf32>
    %c0_9 = arith.constant 0 : index
    %c0_10 = arith.constant 0 : index
    %11 = vector.load %arg5[%c0_9, %c0_10] : memref<32x1xf32, #tpu.memory_space<vmem>>, vector<32x1xf32>
    %12 = vector.broadcast %11 : vector<32x1xf32> to vector<32x128xf32>
    %13 = arith.addf %10, %12 : vector<32x128xf32>
    %cst_11 = arith.constant 0.000000e+00 : f32
    %14 = vector.broadcast %cst_11 : f32 to vector<32x128xf32>
    %15 = arith.maximumf %13, %14 : vector<32x128xf32>
    %16 = arith.truncf %15 : vector<32x128xf32> to vector<32x128xbf16>
    %c0_12 = arith.constant 0 : index
    %c0_13 = arith.constant 0 : index
    %17 = vector.load %arg6[%c0_12, %c0_13] : memref<5x32xbf16, #tpu.memory_space<vmem>>, vector<5x32xbf16>
    %cst_14 = arith.constant dense<0.000000e+00> : vector<5x128xf32>
    %18 = tpu.matmul %17, %16, %cst_14 {dimension_numbers = #tpu.dot_dimension_numbers<[1], [0], [0], [1], [0, 0, 1, 1], [], []>} : vector<5x32xbf16>, vector<32x128xbf16>, vector<5x128xf32> -> vector<5x128xf32>
    %c0_15 = arith.constant 0 : index
    %c0_16 = arith.constant 0 : index
    %19 = vector.load %arg7[%c0_15, %c0_16] : memref<5x1xf32, #tpu.memory_space<vmem>>, vector<5x1xf32>
    %20 = vector.broadcast %19 : vector<5x1xf32> to vector<5x128xf32>
    %21 = arith.addf %18, %20 : vector<5x128xf32>
    %c0_17 = arith.constant 0 : index
    %c0_18 = arith.constant 0 : index
    %22 = vector.load %arg8[%c0_17, %c0_18] : memref<5x128xf32, #tpu.memory_space<vmem>>, vector<5x128xf32>
    tpu.vector_store %arg8[%c0_17, %c0_18], %21 {strides = array<i32>} : memref<5x128xf32, #tpu.memory_space<vmem>>, vector<5x128xf32>,
    return
  }
  func.func @transform_0(%arg0: i32) -> (i32, i32) {
    %c0_i32 = arith.constant 0 : i32
    %c0_i32_0 = arith.constant 0 : i32
    return %c0_i32, %arg0 : i32, i32
  }
  func.func @transform_1(%arg0: i32) -> (i32, i32) {
    %c0_i32 = arith.constant 0 : i32
    %c0_i32_0 = arith.constant 0 : i32
    %c0_i32_1 = arith.constant 0 : i32
    return %c0_i32, %c0_i32_0 : i32, i32
  }
  func.func @transform_2(%arg0: i32) -> (i32, i32) {
    %c0_i32 = arith.constant 0 : i32
    %c0_i32_0 = arith.constant 0 : i32
    %c0_i32_1 = arith.constant 0 : i32
    return %c0_i32, %c0_i32_0 : i32, i32
  }
  func.func @transform_3(%arg0: i32) -> (i32, i32) {
    %c0_i32 = arith.constant 0 : i32
    %c0_i32_0 = arith.constant 0 : i32
    %c0_i32_1 = arith.constant 0 : i32
    return %c0_i32, %c0_i32_0 : i32, i32
  }
  func.func @transform_4(%arg0: i32) -> (i32, i32) {
    %c0_i32 = arith.constant 0 : i32
    %c0_i32_0 = arith.constant 0 : i32
    %c0_i32_1 = arith.constant 0 : i32
    return %c0_i32, %c0_i32_0 : i32, i32
  }
  func.func @transform_5(%arg0: i32) -> (i32, i32) {
    %c0_i32 = arith.constant 0 : i32
    %c0_i32_0 = arith.constant 0 : i32
    %c0_i32_1 = arith.constant 0 : i32
    return %c0_i32, %c0_i32_0 : i32, i32
  }
  func.func @transform_6(%arg0: i32) -> (i32, i32) {
    %c0_i32 = arith.constant 0 : i32
    %c0_i32_0 = arith.constant 0 : i32
    %c0_i32_1 = arith.constant 0 : i32
    return %c0_i32, %c0_i32_0 : i32, i32
  }
  func.func @transform_7(%arg0: i32) -> (i32, i32) {
    %c0_i32 = arith.constant 0 : i32
    %c0_i32_0 = arith.constant 0 : i32
    return %c0_i32, %arg0 : i32, i32
  }
}

</mosaic_0001>

<llo_original>
// kernel: npznet_forward.1
$region0: #{npznet_forward.1}
  #allocation0 [shape = 'u32[]', space=smem, size = 0x4, offset = 0x4, fixed_abs, tag = 'smem constant byte address 0x4 - core index']
  #allocation1 [shape = 'u32[72,128]{1,0:T(1,128)}', space=vmem, size = 0x9000, scoped, tag = 'internal scratch']
  %s0 = inlined_call_operand.vmem [shape: bf16[6,128], index: 0, kind: input, shape index: {}]
  %s1 = inlined_call_operand.vmem [shape: bf16[64,6], index: 1, kind: input, shape index: {}]
  %s2 = inlined_call_operand.vmem [shape: f32[64,1], index: 2, kind: input, shape index: {}]
  %s3 = inlined_call_operand.vmem [shape: bf16[32,64], index: 3, kind: input, shape index: {}]
  %s4 = inlined_call_operand.vmem [shape: f32[32,1], index: 4, kind: input, shape index: {}]
  %s5 = inlined_call_operand.vmem [shape: bf16[5,32], index: 5, kind: input, shape index: {}]
  %s6 = inlined_call_operand.vmem [shape: f32[5,1], index: 6, kind: input, shape index: {}]
  %s7 = inlined_call_operand.vmem [shape: f32[5,128], index: 7, kind: output, shape index: {}]
  %s8 = sld [smem:[#allocation0]]
  $region38: #{npznet_forward.1} parent=0
    _
  %s10 = ssub.s32 1, %s8
  %s11 = scalar_select 0, %s10, %s8
  // Predicated region
  $region2: #{npznet_forward.1} parent=0 // pred_check
    _
  $region3: #{npznet_forward.1} parent=0 // pred_check_branch
    %13 = sbr.rel (0) target = $region5
  $region4: #{npznet_forward.1} parent=0 // pred_region
    _
  $region5: #{npznet_forward.1} parent=0 // pred_fallthru
    _
  // Predicated region
  $region6: #{npznet_forward.1} parent=0 // pred_check
    _
  $region7: #{npznet_forward.1} parent=0 // pred_check_branch
    %15 = sbr.rel (0) target = $region9
  $region8: #{npznet_forward.1} parent=0 // pred_region
    _
  $region9: #{npznet_forward.1} parent=0 // pred_fallthru
    _
  // Predicated region
  $region10: #{npznet_forward.1} parent=0 // pred_check
    _
  $region11: #{npznet_forward.1} parent=0 // pred_check_branch
    %17 = sbr.rel (0) target = $region13
  $region12: #{npznet_forward.1} parent=0 // pred_region
    _
  $region13: #{npznet_forward.1} parent=0 // pred_fallthru
    _
  // Predicated region
  $region14: #{npznet_forward.1} parent=0 // pred_check
    _
  $region15: #{npznet_forward.1} parent=0 // pred_check_branch
    %19 = sbr.rel (0) target = $region17
  $region16: #{npznet_forward.1} parent=0 // pred_region
    _
  $region17: #{npznet_forward.1} parent=0 // pred_fallthru
    _
  // Predicated region
  $region18: #{npznet_forward.1} parent=0 // pred_check
    _
  $region19: #{npznet_forward.1} parent=0 // pred_check_branch
    %21 = sbr.rel (0) target = $region21
  $region20: #{npznet_forward.1} parent=0 // pred_region
    _
  $region21: #{npznet_forward.1} parent=0 // pred_fallthru
    _
  // Predicated region
  $region22: #{npznet_forward.1} parent=0 // pred_check
    _
  $region23: #{npznet_forward.1} parent=0 // pred_check_branch
    %23 = sbr.rel (0) target = $region25
  $region24: #{npznet_forward.1} parent=0 // pred_region
    _
  $region25: #{npznet_forward.1} parent=0 // pred_fallthru
    _
  // Predicated region
  $region26: #{npznet_forward.1} parent=0 // pred_check
    _
  $region27: #{npznet_forward.1} parent=0 // pred_check_branch
    %25 = sbr.rel (0) target = $region29
  $region28: #{npznet_forward.1} parent=0 // pred_region
    _
  $region29: #{npznet_forward.1} parent=0 // pred_fallthru
    _
  %v27 = vld [vmem:[%s0] sm:$0x7]
  %v28 = vld [vmem:[%s1] sm:$0xf]
  %v29 = vld [vmem:[%s1 + $0x4] sm:$0xf]
  %v30 = vld [vmem:[%s1 + $0x8] sm:$0xf]
  %v31 = vld [vmem:[%s1 + $0xc] sm:$0xf]
  %v32 = vld [vmem:[%s1 + $0x10] sm:$0xf]
  %v33 = vld [vmem:[%s1 + $0x14] sm:$0xf]
  %v34 = vld [vmem:[%s1 + $0x18] sm:$0xf]
  %v35 = vld [vmem:[%s1 + $0x1c] sm:$0xf]
  %v36 = vld [vmem:[%s2] sm:$0xff]
  %v37 = vld [vmem:[%s2 + $0x8] sm:$0xff]
  %v38 = vld [vmem:[%s2 + $0x10] sm:$0xff]
  %v39 = vld [vmem:[%s2 + $0x18] sm:$0xff]
  %v40 = vld [vmem:[%s2 + $0x20] sm:$0xff]
  %v41 = vld [vmem:[%s2 + $0x28] sm:$0xff]
  %v42 = vld [vmem:[%s2 + $0x30] sm:$0xff]
  %v43 = vld [vmem:[%s2 + $0x38] sm:$0xff]
  %45 = vset.pattern.permute.xlu0 0
  %46 = vperm.xlu0 %45, %v36
  %v47 = vpop.permute.xlu0 %46
  %50 = vset.pattern.permute.xlu0 0
  %51 = vperm.xlu0 %50, %v37
  %v52 = vpop.permute.xlu0 %51
  %55 = vset.pattern.permute.xlu0 0
  %56 = vperm.xlu0 %55, %v38
  %v57 = vpop.permute.xlu0 %56
  %60 = vset.pattern.permute.xlu0 0
  %61 = vperm.xlu0 %60, %v39
  %v62 = vpop.permute.xlu0 %61
  %65 = vset.pattern.permute.xlu0 0
  %66 = vperm.xlu0 %65, %v40
  %v67 = vpop.permute.xlu0 %66
  %70 = vset.pattern.permute.xlu0 0
  %71 = vperm.xlu0 %70, %v41
  %v72 = vpop.permute.xlu0 %71
  %75 = vset.pattern.permute.xlu0 0
  %76 = vperm.xlu0 %75, %v42
  %v77 = vpop.permute.xlu0 %76
  %80 = vset.pattern.permute.xlu0 0
  %81 = vperm.xlu0 %80, %v43
  %v82 = vpop.permute.xlu0 %81
  %v92 = vunpack.c.l.b16 %v28
  %v93 = vunpack.c.l.b16 %v29
  %v94 = vunpack.c.l.b16 %v30
  %v95 = vunpack.c.l.b16 %v31
  %v96 = vunpack.c.l.b16 %v32
  %v97 = vunpack.c.l.b16 %v33
  %v98 = vunpack.c.l.b16 %v34
  %v99 = vunpack.c.l.b16 %v35
  %v100 = vpack.c.b16 %v93, %v92
  %v101 = vpack.c.b16 %v95, %v94
  %v102 = vpack.c.b16 %v97, %v96
  %v103 = vpack.c.b16 %v99, %v98
  %vm104 = vcmask 48128
  %v106 = vsel %vm104, %v100, 0
  %v109 = vsel %vm104, %v101, 0
  %v112 = vsel %vm104, %v102, 0
  %v115 = vsel %vm104, %v103, 0
  %vm117 = vcmask 1042432
  %v119 = vsel %vm117, %v27, 0
  %121 = vmatpush.bf16.msra.mxu0 0
  %122 = vmatpush.bf16.msra.mxu0 0
  %123 = vmatpush.bf16.msra.mxu0 0
  %124 = vmatpush.bf16.msra.mxu0 0
  %125 = vmatpush.bf16.msra.mxu0 0
  %126 = vmatpush.bf16.msra.mxu0 0
  %127 = vmatpush.bf16.msra.mxu0 0
  %128 = vmatpush.bf16.msra.mxu0 %v119
  %129 = vmatmul.bf16.gmra.mxu0 %v106
  %v130 = vpop.f32.mrf.mxu0
  %v131 = vadd.f32 %v47, %v130
  %v132 = vpop.f32.mrf.mxu0
  %v133 = vadd.f32 %v52, %v132
  %134 = vmatmul.bf16.gmra.mxu0 %v109
  %v135 = vpop.f32.mrf.mxu0
  %v136 = vadd.f32 %v57, %v135
  %v137 = vpop.f32.mrf.mxu0
  %v138 = vadd.f32 %v62, %v137
  %139 = vmatmul.bf16.gmra.mxu0 %v112
  %v140 = vpop.f32.mrf.mxu0
  %v141 = vadd.f32 %v67, %v140
  %v142 = vpop.f32.mrf.mxu0
  %v143 = vadd.f32 %v72, %v142
  %144 = vmatmul.bf16.gmra.mxu0 %v115
  %v145 = vpop.f32.mrf.mxu0
  %v146 = vadd.f32 %v77, %v145
  %v147 = vpop.f32.mrf.mxu0
  %v148 = vadd.f32 %v82, %v147
  %149 = vdwg.mxu0
  %v150 = vmax.f32 %v131, 0.0
  %v151 = vmax.f32 %v133, 0.0
  %v152 = vmax.f32 %v136, 0.0
  %v153 = vmax.f32 %v138, 0.0
  %v154 = vmax.f32 %v141, 0.0
  %v155 = vmax.f32 %v143, 0.0
  %v156 = vmax.f32 %v146, 0.0
  %v157 = vmax.f32 %v148, 0.0
  %v158 = vpack.c.bf16 %v151, %v150
  %v159 = vpack.c.bf16 %v153, %v152
  %v160 = vpack.c.bf16 %v155, %v154
  %v161 = vpack.c.bf16 %v157, %v156
  %v162 = vld [vmem:[%s3] sm:$0xf]
  %v163 = vld [vmem:[%s3 + $0x4] sm:$0xf]
  %v164 = vld [vmem:[%s3 + $0x8] sm:$0xf]
  %v165 = vld [vmem:[%s3 + $0xc] sm:$0xf]
  %v166 = vld [vmem:[%s4] sm:$0xff]
  %v167 = vld [vmem:[%s4 + $0x8] sm:$0xff]
  %v168 = vld [vmem:[%s4 + $0x10] sm:$0xff]
  %v169 = vld [vmem:[%s4 + $0x18] sm:$0xff]
  %171 = vset.pattern.permute.xlu0 0
  %172 = vperm.xlu0 %171, %v166
  %v173 = vpop.permute.xlu0 %172
  %176 = vset.pattern.permute.xlu0 0
  %177 = vperm.xlu0 %176, %v167
  %v178 = vpop.permute.xlu0 %177
  %181 = vset.pattern.permute.xlu0 0
  %182 = vperm.xlu0 %181, %v168
  %v183 = vpop.permute.xlu0 %182
  %186 = vset.pattern.permute.xlu0 0
  %187 = vperm.xlu0 %186, %v169
  %v188 = vpop.permute.xlu0 %187
  %v194 = vunpack.c.l.b16 %v162
  %v195 = vunpack.c.l.b16 %v163
  %v196 = vunpack.c.l.b16 %v164
  %v197 = vunpack.c.l.b16 %v165
  %v198 = vpack.c.b16 %v195, %v194
  %v199 = vpack.c.b16 %v197, %v196
  %vm200 = vcmask 523264
  %v202 = vsel %vm200, %v198, 0
  %v205 = vsel %vm200, %v199, 0
  %207 = vmatpush.bf16.msra.mxu0 0
  %208 = vmatpush.bf16.msra.mxu0 0
  %209 = vmatpush.bf16.msra.mxu0 0
  %210 = vmatpush.bf16.msra.mxu0 0
  %211 = vmatpush.bf16.msra.mxu0 %v161
  %212 = vmatpush.bf16.msra.mxu0 %v160
  %213 = vmatpush.bf16.msra.mxu0 %v159
  %214 = vmatpush.bf16.msra.mxu0 %v158
  %215 = vmatmul.bf16.gmra.mxu0 %v202
  %v216 = vpop.f32.mrf.mxu0
  %v217 = vadd.f32 %v173, %v216
  %v218 = vpop.f32.mrf.mxu0
  %v219 = vadd.f32 %v178, %v218
  %220 = vmatmul.bf16.gmra.mxu0 %v205
  %v221 = vpop.f32.mrf.mxu0
  %v222 = vadd.f32 %v183, %v221
  %v223 = vpop.f32.mrf.mxu0
  %v224 = vadd.f32 %v188, %v223
  %225 = vdwg.mxu0
  %v226 = vmax.f32 %v217, 0.0
  %v227 = vmax.f32 %v219, 0.0
  %v228 = vmax.f32 %v222, 0.0
  %v229 = vmax.f32 %v224, 0.0
  %v230 = vpack.c.bf16 %v227, %v226
  %v231 = vpack.c.bf16 %v229, %v228
  %v232 = vld [vmem:[%s5] sm:$0x7]
  %v233 = vld [vmem:[%s6] sm:$0x1f]
  %235 = vset.pattern.permute.xlu0 0
  %236 = vperm.xlu0 %235, %v233
  %v237 = vpop.permute.xlu0 %236
  %vm239 = vcmask 261120
  %v241 = vsel %vm239, %v232, 0
  %243 = vmatpush.bf16.msra.mxu0 0
  %244 = vmatpush.bf16.msra.mxu0 0
  %245 = vmatpush.bf16.msra.mxu0 0
  %246 = vmatpush.bf16.msra.mxu0 0
  %247 = vmatpush.bf16.msra.mxu0 0
  %248 = vmatpush.bf16.msra.mxu0 0
  %249 = vmatpush.bf16.msra.mxu0 %v231
  %250 = vmatpush.bf16.msra.mxu0 %v230
  %251 = vmatmul.bf16.gmra.mxu0 %v241
  %v252 = vpop.f32.mrf.mxu0
  %v253 = vadd.f32 %v237, %v252
  %v254 = vpop.f32.mrf.mxu0
  %255 = vdwg.mxu0
  %256 = vst [vmem:[%s7] sm:$0x1f] %v253
  // Predicated region
  $region30: #{npznet_forward.1} parent=0 // pred_check
    _
  $region31: #{npznet_forward.1} parent=0 // pred_check_branch
    %258 = sbr.rel (0) target = $region33
  $region32: #{npznet_forward.1} parent=0 // pred_region
    _
  $region33: #{npznet_forward.1} parent=0 // pred_fallthru
    _
  // Predicated region
  $region34: #{npznet_forward.1} parent=0 // pred_check
    _
  $region35: #{npznet_forward.1} parent=0 // pred_check_branch
    %260 = sbr.rel (0) target = $region37
  $region36: #{npznet_forward.1} parent=0 // pred_region
    _
  $region37: #{npznet_forward.1} parent=0 // pred_fallthru
    _

</llo_original>
